<compile_context>
chip_gen: v7x
topology: tpu7x:2x2x1
jax: 0.10.0
libtpu: 0.0.40
codegen_flags: <defaults>
</compile_context>

<pallas_src>
import math

import numpy as np
import jax
import jax.numpy as jnp
from jax.experimental import pallas as pl
from jax.experimental.pallas import tpu as pltpu


def _dropout1d_kernel(x_ref, scale_ref, o_ref):
    # x_ref:     (block_rows, L)   input tile, kept in its native dtype
    # scale_ref: (block_rows, 1)   0.0 (dropped) or 1/keep_prob (kept), per row
    # Single multiply; the per-row scale lane-broadcasts over L.
    o_ref[...] = (x_ref[...] * scale_ref[...]).astype(o_ref.dtype)


def _pick_row_block(rows: int, L: int, itemsize: int,
                    target_bytes: int = 2 * 1024 * 1024) -> int:
    """Row tile of ~target_bytes, aligned to the sublane packing of the dtype."""
    sublane = 8 * max(1, 4 // itemsize)         # 8 (f32), 16 (bf16), 32 (int8)
    target = max(sublane, target_bytes // max(1, L * itemsize))
    if target >= rows:
        return rows                             # full extent is always legal
    return max(sublane, (target // sublane) * sublane)


def dropout1d(x, p: float = 0.5, seed: int = 0, training: bool = True):
    """Pallas TPU implementation of tensorkit Dropout1d.forward.

    x: array of shape (..., L), at least 2-D (e.g. (N, C, L) for 1d-conv input).
    """
    if x.ndim < 2:
        raise ValueError(
            "`input` must be at least 2d, but the input shape is {}.".format(x.shape)
        )
    if not training or p <= 0.0:
        return x
    if p >= 1.0:
        # keep_prob == 0: every channel is dropped; avoid the 0 * inf NaN path.
        return jnp.zeros_like(x)

    keep_prob = 1.0 - p
    orig_shape = x.shape
    L = int(orig_shape[-1])
    rows = math.prod(orig_shape[:-1])
    x2 = x.reshape(rows, L)

    # One Bernoulli draw per row (== noise_shape = shape[:-1] + (1,)),
    # with the 1/keep_prob scale pre-folded so the kernel does one multiply.
    key = jax.random.PRNGKey(seed)
    keep = jax.random.bernoulli(key, keep_prob, shape=(rows, 1))
    scale = jnp.where(keep, jnp.float32(1.0 / keep_prob), jnp.float32(0.0))
    scale = scale.astype(x.dtype)

    block_rows = _pick_row_block(rows, L, jnp.dtype(x.dtype).itemsize)
    grid = (pl.cdiv(rows, block_rows),)

    out2 = pl.pallas_call(
        _dropout1d_kernel,
        out_shape=jax.ShapeDtypeStruct((rows, L), x.dtype),
        grid=grid,
        in_specs=[
            pl.BlockSpec((block_rows, L), lambda i: (i, 0)),   # streaming input
            pl.BlockSpec((block_rows, 1), lambda i: (i, 0)),   # per-row scale
        ],
        out_specs=pl.BlockSpec((block_rows, L), lambda i: (i, 0)),
        compiler_params=pltpu.CompilerParams(
            dimension_semantics=("parallel",),   # rows are independent
        ),
    )(x2, scale)

    return out2.reshape(orig_shape)


if __name__ == "__main__":
    key = jax.random.PRNGKey(0)
    # (N, C, L) 1d-conv style input, small shapes.
    N, C, L = 2, 4, 16
    x = jax.random.normal(key, (N, C, L), dtype=jnp.float32)

    p = 0.5
    y = dropout1d(x, p=p, seed=0, training=True)
    y = jax.block_until_ready(y)

    # Sanity checks: each (n, c) row is either all-zero or x / keep_prob.
    keep_prob = 1.0 - p
    y_np = np.asarray(y)
    x_np = np.asarray(x)
    for n in range(N):
        for c in range(C):
            row_y = y_np[n, c]
            row_x = x_np[n, c]
            dropped = np.allclose(row_y, 0.0)
            kept = np.allclose(row_y, row_x / keep_prob, rtol=1e-5, atol=1e-5)
            assert dropped or kept, (
                f"row ({n},{c}) is neither fully dropped nor scaled-kept"
            )

    # Eval mode and p == 0 are identity; p == 1 is all zeros (no NaNs).
    y_eval = dropout1d(x, p=p, seed=0, training=False)
    assert np.allclose(np.asarray(y_eval), x_np)
    y_p0 = dropout1d(x, p=0.0, seed=0, training=True)
    assert np.allclose(np.asarray(y_p0), x_np)
    y_p1 = jax.block_until_ready(dropout1d(x, p=1.0, seed=0, training=True))
    assert np.allclose(np.asarray(y_p1), 0.0)

    print("KERNEL_OK")
</pallas_src>

<mosaic_0001>
module attributes {stable_mosaic.version = 11 : i64} {
  func.func @_dropout1d_kernel(%arg0: i32, %arg1: memref<8x16xf32, #tpu.memory_space<vmem>>, %arg2: memref<8x1xf32, #tpu.memory_space<vmem>>, %arg3: memref<8x16xf32, #tpu.memory_space<vmem>>) attributes {dimension_semantics = [#tpu.dimension_semantics<parallel>], iteration_bounds = array<i64: 1>, scalar_prefetch = 0 : i64, scratch_operands = 0 : i64, tpu.core_type = #tpu.core_type<tc>, window_params = [{transform_indices = @transform_0, window_bounds = array<i64: 8, 16>}, {transform_indices = @transform_1, window_bounds = array<i64: 8, 1>}, {transform_indices = @transform_2, window_bounds = array<i64: 8, 16>}]} {
    %c0 = arith.constant 0 : index
    %c0_0 = arith.constant 0 : index
    %0 = vector.load %arg1[%c0, %c0_0] : memref<8x16xf32, #tpu.memory_space<vmem>>, vector<8x16xf32>
    %c0_1 = arith.constant 0 : index
    %c0_2 = arith.constant 0 : index
    %1 = vector.load %arg2[%c0_1, %c0_2] : memref<8x1xf32, #tpu.memory_space<vmem>>, vector<8x1xf32>
    %2 = vector.broadcast %1 : vector<8x1xf32> to vector<8x16xf32>
    %3 = arith.mulf %0, %2 : vector<8x16xf32>
    %c0_3 = arith.constant 0 : index
    %c0_4 = arith.constant 0 : index
    %4 = vector.load %arg3[%c0_3, %c0_4] : memref<8x16xf32, #tpu.memory_space<vmem>>, vector<8x16xf32>
    tpu.vector_store %arg3[%c0_3, %c0_4], %3 {strides = array<i32>} : memref<8x16xf32, #tpu.memory_space<vmem>>, vector<8x16xf32>,
    return
  }
  func.func @transform_0(%arg0: i32) -> (i32, i32) {
    %c0_i32 = arith.constant 0 : i32
    %c0_i32_0 = arith.constant 0 : i32
    return %arg0, %c0_i32 : i32, i32
  }
  func.func @transform_1(%arg0: i32) -> (i32, i32) {
    %c0_i32 = arith.constant 0 : i32
    %c0_i32_0 = arith.constant 0 : i32
    return %arg0, %c0_i32 : i32, i32
  }
  func.func @transform_2(%arg0: i32) -> (i32, i32) {
    %c0_i32 = arith.constant 0 : i32
    %c0_i32_0 = arith.constant 0 : i32
    return %arg0, %c0_i32 : i32, i32
  }
}

</mosaic_0001>

<llo_original>
// kernel: tpu_custom_call.1
$region0: #{tpu_custom_call.1}
  #allocation0 [shape = 'u32[]', space=smem, size = 0x4, offset = 0x4, fixed_abs, tag = 'smem constant byte address 0x4 - core index']
  #allocation1 [shape = 'u32[144,128]{1,0:T(1,128)}', space=vmem, size = 0x12000, scoped, tag = 'internal scratch']
  %s0 = inlined_call_operand.vmem [shape: f32[8,16], index: 0, kind: input, shape index: {}]
  %s1 = inlined_call_operand.vmem [shape: f32[8,1], index: 1, kind: input, shape index: {}]
  %s2 = inlined_call_operand.hbm [shape: f32[8,16], index: 2, kind: output, shape index: {}]
  %s3 = sld [smem:[#allocation0]]
  $region18: #{tpu_custom_call.1} parent=0
    _
  %s5 = ssub.s32 1, %s3
  %s6 = scalar_select 0, %s5, %s3
  $region1: #{tpu_custom_call.1} parent=0
    #allocation2 [shape = 'u8[4096]{0}', space=vmem, size = 0x1000, scoped, tag = 'output window, operand 0, single buffered']
    #allocation3 [shape = 's32[1]{0}', space=sflag, size = 0x4, scoped, tag = 'scoped memory for tpu_custom_call.1']
    %7 = vsyncpa [#allocation3], 0
    // Predicated region
    $region2: #{tpu_custom_call.1} parent=1 // pred_check
      _
    $region3: #{tpu_custom_call.1} parent=1 // pred_check_branch
      %9 = sbr.rel (0) target = $region5
    $region4: #{tpu_custom_call.1} parent=1 // pred_region
      _
    $region5: #{tpu_custom_call.1} parent=1 // pred_fallthru
      _
    // Predicated region
    $region6: #{tpu_custom_call.1} parent=1 // pred_check
      _
    $region7: #{tpu_custom_call.1} parent=1 // pred_check_branch
      %11 = sbr.rel (0) target = $region9
    $region8: #{tpu_custom_call.1} parent=1 // pred_region
      _
    $region9: #{tpu_custom_call.1} parent=1 // pred_fallthru
      _
    %v12 = vld [vmem:[%s0] sm:$0xff]
    %v13 = vld [vmem:[%s1] sm:$0xff]
    %15 = vset.pattern.permute.xlu0 0
    %16 = vperm.xlu0 %15, %v13
    %v17 = vpop.permute.xlu0 %16
    %v19 = vmul.f32 %v12, %v17
    %vm20 = vcmask 130048
    %21 = vst.msk [vmem:[#allocation2] sm:$0xff] %vm20, %v19
    // Predicated region
    $region10: #{tpu_custom_call.1} parent=1 // pred_check
      _
    $region11: #{tpu_custom_call.1} parent=1 // pred_check_branch
      %23 = sbr.rel (0) target = $region13
    $region12: #{tpu_custom_call.1} parent=1 // pred_region
      %s25 = ssub.s32 128, 128
      %26 = vsyncadd [#allocation3], %s25
      %s28 = sshll.u32 [#allocation2], 4
      %s29 = int_to_ptr.vmem [resolvable:$true] %s28
      %31 = dma.vmem_to_hbm [thread:$0]  %s29, 128, %s2, [#allocation3]
    $region13: #{tpu_custom_call.1} parent=1 // pred_fallthru
      _
    // Predicated region
    $region14: #{tpu_custom_call.1} parent=1 // pred_check
      _
    $region15: #{tpu_custom_call.1} parent=1 // pred_check_branch
      %33 = sbr.rel (0) target = $region17
    $region16: #{tpu_custom_call.1} parent=1 // pred_region
      %34 = dma.done [#allocation3], 128
    $region17: #{tpu_custom_call.1} parent=1 // pred_fallthru
      _
    %35 = vsyncpa [#allocation3], 1

</llo_original>
